<compile_context>
chip_gen: v7x
topology: tpu7x:2x2x1
jax: 0.10.0
libtpu: 0.0.40
codegen_flags: <defaults>
</compile_context>

<pallas_src>
import functools

import jax
import jax.numpy as jnp
from jax.experimental import pallas as pl
from jax.experimental.pallas import tpu as pltpu

CONV_K = 25          # conv kernel size
POOL_K = 3           # maxpool window
POOL_S = 3           # maxpool stride
C_IN = 4
C_OUT = 24
KDIM = CONV_K * C_IN          # 100
KPAD = 128                    # contraction dim padded to one full lane tile
BN_EPS = 1e-5
_INV_SQRT2 = 0.7071067811865476
_HI = jax.lax.Precision.HIGHEST


def _erf_approx(x):
    # Abramowitz & Stegun 7.1.26 (|err| < 1.5e-7); avoids relying on lax.erf lowering.
    a1, a2, a3, a4, a5 = 0.254829592, -0.284496736, 1.421413741, -1.453152027, 1.061405429
    p = 0.3275911
    sgn = jnp.where(x >= 0.0, 1.0, -1.0)
    ax = jnp.abs(x)
    t = 1.0 / (1.0 + p * ax)
    poly = ((((a5 * t + a4) * t + a3) * t + a2) * t + a1) * t
    return sgn * (1.0 - poly * jnp.exp(-ax * ax))


def _gelu_exact(x):
    return 0.5 * x * (1.0 + _erf_approx(x * _INV_SQRT2))


def _sigmoid(x):
    return 1.0 / (1.0 + jnp.exp(-x))


def conv_pool_kernel(xcolT_ref, wT_ref, cb_ref, feat_ref, stats_ref):
    """Per batch tile: conv (single bf16 MXU matmul), maxpool, exp, BN partial
    sums and per-sample length means.  Channel-major: 24 channels on sublanes,
    positions lane-dense."""
    three_mt = xcolT_ref.shape[1]
    mt = three_mt // POOL_K                  # bt * l_pool pooled positions in this tile
    c_out, bt = feat_ref.shape
    l_pool = mt // bt

    # conv1d for the whole tile as ONE (24, 128) x (128, 3*mt) matmul, f32 accumulation.
    conv = jnp.dot(wT_ref[...], xcolT_ref[...],
                   preferred_element_type=jnp.float32)           # (24, 3*mt)

    # MaxPool1d(k=3, s=3): max over three contiguous, lane-aligned column blocks.
    # Bias is per-channel and exp is monotonic, so bias-add and exp happen AFTER
    # the max (3x fewer VPU adds / EUP transcendentals; exactly equivalent).
    pooled = jnp.maximum(jnp.maximum(conv[:, 0:mt], conv[:, mt:2 * mt]),
                         conv[:, 2 * mt:3 * mt]) + cb_ref[...]    # (24, mt)
    e = jnp.exp(pooled)

    # Single-pass BN partial statistics for this tile (sum, sum of squares).
    stats_ref[0:c_out, :] = jnp.sum(e, axis=1, keepdims=True)
    stats_ref[c_out:2 * c_out, :] = jnp.sum(e * e, axis=1, keepdims=True)

    # Per-sample mean over length via a selector matmul (avoids a lane-crossing
    # reshape of the pooled block); selector built in-kernel from iota, no HBM cost.
    col = jax.lax.broadcasted_iota(jnp.int32, (mt, bt), 0)
    smp = jax.lax.broadcasted_iota(jnp.int32, (mt, bt), 1)
    sel = jnp.where((col >= smp * l_pool) & (col < (smp + 1) * l_pool),
                    1.0 / l_pool, 0.0).astype(jnp.float32)
    feat_ref[...] = jnp.dot(e, sel, preferred_element_type=jnp.float32,
                            precision=_HI)                        # (24, bt)


def bn_classifier_kernel(feat_ref, stats_ref, gamma_ref, beta_ref,
                         w1_ref, b1_ref, w2_ref, b2_ref, out_ref, *, inv_count):
    """Finalize: global training-mode BN stats -> per-channel affine on the
    per-sample means (BN commutes with the length mean), then the tiny
    classifier.  Channel/target-major, batch on lanes."""
    c_out = feat_ref.shape[0]
    s = jnp.sum(stats_ref[...], axis=1, keepdims=True)            # (48, 1)
    mu = s[0:c_out, :] * inv_count                                 # (24, 1)
    ex2 = s[c_out:2 * c_out, :] * inv_count
    var = ex2 - mu * mu                                            # biased batch variance
    scale = jax.lax.rsqrt(var + BN_EPS) * gamma_ref[...]
    feat = (feat_ref[...] - mu) * scale + beta_ref[...]            # (24, N)

    h = jnp.dot(w1_ref[...], feat, preferred_element_type=jnp.float32,
                precision=_HI) + b1_ref[...]                       # (Tpad, N)
    h = _gelu_exact(h)
    h = jnp.dot(w2_ref[...], h, preferred_element_type=jnp.float32,
                precision=_HI) + b2_ref[...]
    out_ref[...] = _sigmoid(h)


def deepsea25_forward(x_ncl, params, *, batch_tile=None):
    """x_ncl: (N, 4, L) float32, PyTorch NCL layout."""
    n, c_in, seq_len = x_ncl.shape
    assert c_in == C_IN
    l_out = seq_len - CONV_K + 1
    l_pool = (l_out - POOL_K) // POOL_S + 1
    l_used = l_pool * POOL_S
    n_targets = params["fc1_b"].shape[0]
    t_pad = ((n_targets + 7) // 8) * 8

    # Pick the smallest batch tile whose per-tile im2col columns (3*bt*l_pool) are a
    # multiple of 128 (lane-aligned blocks); fall back to a single full block.
    # TODO(synk): at production sizes also cap the tile by VMEM budget (~16-32 samples
    # at L~1000 under the 48 MiB limit) and do the im2col in-kernel from raw x.
    if batch_tile is None:
        batch_tile = n
        for cand in range(1, n):
            if n % cand == 0 and (POOL_K * cand * l_pool) % 128 == 0:
                batch_tile = cand
                break
    bt = batch_tile
    num_tiles = n // bt
    mt = bt * l_pool
    total_cols = num_tiles * POOL_K * mt

    # --- im2col, transposed/lane-dense, columns grouped (tile, pool-offset j, sample, pos) ---
    x_nlc = jnp.transpose(x_ncl, (0, 2, 1)).astype(jnp.float32)          # (N, L, 4)
    idx = jnp.arange(l_used)[:, None] + jnp.arange(CONV_K)[None, :]       # (l_used, 25)
    xcol = x_nlc[:, idx, :].reshape(n, l_pool, POOL_K, KDIM)              # (N, p, j, 100)
    xcol = xcol.reshape(num_tiles, bt, l_pool, POOL_K, KDIM)
    xcolT = jnp.transpose(xcol, (4, 0, 3, 1, 2)).reshape(KDIM, total_cols)
    xcolT = jnp.pad(xcolT, ((0, KPAD - KDIM), (0, 0))).astype(jnp.bfloat16)

    # conv weights channel-major (24, 100), K padded to 128, bf16 for the MXU.
    wT = jnp.transpose(params["conv_w"], (0, 2, 1)).reshape(C_OUT, KDIM)
    wT = jnp.pad(wT, ((0, 0), (0, KPAD - KDIM))).astype(jnp.bfloat16)
    cb = params["conv_b"].reshape(C_OUT, 1).astype(jnp.float32)

    cost = pl.CostEstimate(
        flops=2 * C_OUT * KPAD * total_cols + 2 * C_OUT * mt * bt * num_tiles,
        transcendentals=C_OUT * mt * num_tiles,
        bytes_accessed=int(xcolT.size) * 2 + int(wT.size) * 2 + C_OUT * 4
                       + num_tiles * C_OUT * bt * 4 + num_tiles * 2 * C_OUT * 4)

    feat_tiles, stats_tiles = pl.pallas_call(
        conv_pool_kernel,
        out_shape=(jax.ShapeDtypeStruct((num_tiles, C_OUT, bt), jnp.float32),
                   jax.ShapeDtypeStruct((num_tiles, 2 * C_OUT, 1), jnp.float32)),
        grid=(num_tiles,),
        in_specs=[pl.BlockSpec((KPAD, POOL_K * mt), lambda t: (0, t)),
                  pl.BlockSpec((C_OUT, KPAD), lambda t: (0, 0)),
                  pl.BlockSpec((C_OUT, 1), lambda t: (0, 0))],
        out_specs=(pl.BlockSpec((None, C_OUT, bt), lambda t: (t, 0, 0)),
                   pl.BlockSpec((None, 2 * C_OUT, 1), lambda t: (t, 0, 0))),
        compiler_params=pltpu.CompilerParams(
            dimension_semantics=("parallel",),            # megacore-shardable on v7x
            vmem_limit_bytes=48 * 1024 * 1024),
        cost_estimate=cost,
    )(xcolT, wT, cb)

    # --- tiny finalize kernel: global BN stats + classifier -----------------------------
    feat_cn = jnp.transpose(feat_tiles, (1, 0, 2)).reshape(C_OUT, n)      # (24, N)
    stats2d = jnp.transpose(stats_tiles[:, :, 0], (1, 0))                 # (48, num_tiles)
    gamma = params["gamma"].reshape(C_OUT, 1).astype(jnp.float32)
    beta = params["beta"].reshape(C_OUT, 1).astype(jnp.float32)
    w1 = jnp.pad(params["fc1_w"], ((0, t_pad - n_targets), (0, 0))).astype(jnp.float32)
    b1 = jnp.pad(params["fc1_b"], (0, t_pad - n_targets)).reshape(t_pad, 1).astype(jnp.float32)
    w2 = jnp.pad(params["fc2_w"],
                 ((0, t_pad - n_targets), (0, t_pad - n_targets))).astype(jnp.float32)
    b2 = jnp.pad(params["fc2_b"], (0, t_pad - n_targets)).reshape(t_pad, 1).astype(jnp.float32)

    inputs = (feat_cn, stats2d, gamma, beta, w1, b1, w2, b2)

    def _full(shape):
        nd = len(shape)
        return pl.BlockSpec(shape, lambda i, _nd=nd: (0,) * _nd)

    out_tn = pl.pallas_call(
        functools.partial(bn_classifier_kernel, inv_count=1.0 / float(n * l_pool)),
        out_shape=jax.ShapeDtypeStruct((t_pad, n), jnp.float32),
        grid=(1,),
        in_specs=[_full(a.shape) for a in inputs],
        out_specs=_full((t_pad, n)),
        compiler_params=pltpu.CompilerParams(dimension_semantics=("arbitrary",)),
    )(*inputs)

    return jnp.transpose(out_tn)[:, :n_targets]                           # (N, n_targets)


def init_params(key, n_targets):
    """Deterministic synthetic parameters (PyTorch-style uniform init, native shapes)."""
    ks = jax.random.split(key, 6)
    b_conv = 1.0 / (C_IN * CONV_K) ** 0.5
    b_fc1 = 1.0 / C_OUT ** 0.5
    b_fc2 = 1.0 / n_targets ** 0.5
    return dict(
        conv_w=jax.random.uniform(ks[0], (C_OUT, C_IN, CONV_K), jnp.float32, -b_conv, b_conv),
        conv_b=jax.random.uniform(ks[1], (C_OUT,), jnp.float32, -b_conv, b_conv),
        gamma=jnp.ones((C_OUT,), jnp.float32),              # BatchNorm1d defaults
        beta=jnp.zeros((C_OUT,), jnp.float32),
        fc1_w=jax.random.uniform(ks[2], (n_targets, C_OUT), jnp.float32, -b_fc1, b_fc1),
        fc1_b=jax.random.uniform(ks[3], (n_targets,), jnp.float32, -b_fc1, b_fc1),
        fc2_w=jax.random.uniform(ks[4], (n_targets, n_targets), jnp.float32, -b_fc2, b_fc2),
        fc2_b=jax.random.uniform(ks[5], (n_targets,), jnp.float32, -b_fc2, b_fc2),
    )


def reference_forward(x_ncl, params):
    """Pure-JAX reference matching the PyTorch module (training-mode BN), f32 throughout."""
    x = jnp.transpose(x_ncl, (0, 2, 1)).astype(jnp.float32)     # (N, L, 4)
    n, seq_len, _ = x.shape
    l_out = seq_len - CONV_K + 1
    l_pool = (l_out - POOL_K) // POOL_S + 1
    w_taps = jnp.transpose(params["conv_w"], (2, 1, 0))          # (k, c_in, c_out)
    conv = sum(jnp.einsum("nlc,cd->nld", x[:, k:k + l_out, :], w_taps[k])
               for k in range(CONV_K)) + params["conv_b"]
    e = jnp.exp(conv)
    pooled = e[:, :l_pool * POOL_S, :].reshape(n, l_pool, POOL_S, C_OUT).max(axis=2)
    mu = jnp.mean(pooled, axis=(0, 1), keepdims=True)
    var = jnp.mean((pooled - mu) ** 2, axis=(0, 1), keepdims=True)
    y = (pooled - mu) * jax.lax.rsqrt(var + BN_EPS) * params["gamma"] + params["beta"]
    feat = jnp.mean(y, axis=1)                                   # (N, 24)
    h = feat @ params["fc1_w"].T + params["fc1_b"]
    h = jax.nn.gelu(h, approximate=False)
    h = h @ params["fc2_w"].T + params["fc2_b"]
    return jax.nn.sigmoid(h)


if __name__ == "__main__":
    key = jax.random.PRNGKey(0)
    kx, kp = jax.random.split(key)

    # seq_len=216 -> conv length 192, pooled length 64; with batch_tile=2 the per-tile
    # im2col block is (128, 384): lane-aligned and the grid has 2 "parallel" steps.
    batch = 4
    seq_len = 216
    n_targets = 8

    x = jax.random.normal(kx, (batch, C_IN, seq_len), jnp.float32)   # NCL like PyTorch
    params = init_params(kp, n_targets)

    out = jax.block_until_ready(deepsea25_forward(x, params))
    assert out.shape == (batch, n_targets)

    ref = reference_forward(x, params)
    if not bool(jnp.allclose(out, ref, atol=2e-3, rtol=2e-3)):
        raise SystemExit(
            f"MISMATCH: max abs diff = {float(jnp.max(jnp.abs(out - ref)))}")

    print("KERNEL_OK")
</pallas_src>

<mosaic_0001>
module attributes {stable_mosaic.version = 11 : i64} {
  func.func @conv_pool_kernel(%arg0: i32, %arg1: memref<128x384xbf16, #tpu.memory_space<vmem>>, %arg2: memref<24x128xbf16, #tpu.memory_space<vmem>>, %arg3: memref<24x1xf32, #tpu.memory_space<vmem>>, %arg4: memref<1x24x2xf32, #tpu.memory_space<vmem>>, %arg5: memref<1x48x1xf32, #tpu.memory_space<vmem>>) attributes {dimension_semantics = [#tpu.dimension_semantics<parallel>], iteration_bounds = array<i64: 2>, scalar_prefetch = 0 : i64, scratch_operands = 0 : i64, tpu.core_type = #tpu.core_type<tc>, window_params = [{transform_indices = @transform_0, window_bounds = array<i64: 128, 384>}, {pipeline_mode = #tpu.pipeline_mode<synchronous>, transform_indices = @transform_1, window_bounds = array<i64: 24, 128>}, {pipeline_mode = #tpu.pipeline_mode<synchronous>, transform_indices = @transform_2, window_bounds = array<i64: 24, 1>}, {transform_indices = @transform_3, window_bounds = array<i64: 1, 24, 2>}, {transform_indices = @transform_4, window_bounds = array<i64: 1, 48, 1>}]} {
    %c0 = arith.constant 0 : index
    %c0_0 = arith.constant 0 : index
    %0 = vector.load %arg2[%c0, %c0_0] : memref<24x128xbf16, #tpu.memory_space<vmem>>, vector<24x128xbf16>
    %c0_1 = arith.constant 0 : index
    %c0_2 = arith.constant 0 : index
    %1 = vector.load %arg1[%c0_1, %c0_2] : memref<128x384xbf16, #tpu.memory_space<vmem>>, vector<128x384xbf16>
    %cst = arith.constant dense<0.000000e+00> : vector<24x384xf32>
    %2 = tpu.matmul %0, %1, %cst {dimension_numbers = #tpu.dot_dimension_numbers<[1], [0], [0], [1], [0, 0, 1, 1], [], []>} : vector<24x128xbf16>, vector<128x384xbf16>, vector<24x384xf32> -> vector<24x384xf32>
    %3 = vector.extract_strided_slice %2 {offsets = [0, 0], sizes = [24, 128], strides = [1, 1]} : vector<24x384xf32> to vector<24x128xf32>
    %4 = vector.extract_strided_slice %2 {offsets = [0, 128], sizes = [24, 128], strides = [1, 1]} : vector<24x384xf32> to vector<24x128xf32>
    %5 = arith.maximumf %3, %4 : vector<24x128xf32>
    %6 = vector.extract_strided_slice %2 {offsets = [0, 256], sizes = [24, 128], strides = [1, 1]} : vector<24x384xf32> to vector<24x128xf32>
    %7 = arith.maximumf %5, %6 : vector<24x128xf32>
    %c0_3 = arith.constant 0 : index
    %c0_4 = arith.constant 0 : index
    %8 = vector.load %arg3[%c0_3, %c0_4] : memref<24x1xf32, #tpu.memory_space<vmem>>, vector<24x1xf32>
    %9 = vector.broadcast %8 : vector<24x1xf32> to vector<24x128xf32>
    %10 = arith.addf %7, %9 : vector<24x128xf32>
    %11 = math.exp %10 : vector<24x128xf32>
    %cst_5 = arith.constant dense<0.000000e+00> : vector<24xf32>
    %12 = vector.multi_reduction <add>, %11, %cst_5 [1] : vector<24x128xf32> to vector<24xf32>
    %13 = vector.shape_cast %12 : vector<24xf32> to vector<24x1xf32>
    %c0_6 = arith.constant 0 : index
    %c0_7 = arith.constant 0 : index
    %c0_8 = arith.constant 0 : index
    %14 = vector.load %arg5[%c0_6, %c0_7, %c0_8] : memref<1x48x1xf32, #tpu.memory_space<vmem>>, vector<1x24x1xf32>
    %15 = vector.shape_cast %14 : vector<1x24x1xf32> to vector<24x1xf32>
    %16 = vector.shape_cast %13 : vector<24x1xf32> to vector<1x24x1xf32>
    tpu.vector_store %arg5[%c0_6, %c0_7, %c0_8], %16 {strides = array<i32>} : memref<1x48x1xf32, #tpu.memory_space<vmem>>, vector<1x24x1xf32>,
    %17 = arith.mulf %11, %11 : vector<24x128xf32>
    %cst_9 = arith.constant dense<0.000000e+00> : vector<24xf32>
    %18 = vector.multi_reduction <add>, %17, %cst_9 [1] : vector<24x128xf32> to vector<24xf32>
    %19 = vector.shape_cast %18 : vector<24xf32> to vector<24x1xf32>
    %c0_10 = arith.constant 0 : index
    %c24 = arith.constant 24 : index
    %c0_11 = arith.constant 0 : index
    %20 = vector.load %arg5[%c0_10, %c24, %c0_11] : memref<1x48x1xf32, #tpu.memory_space<vmem>>, vector<1x24x1xf32>
    %21 = vector.shape_cast %20 : vector<1x24x1xf32> to vector<24x1xf32>
    %22 = vector.shape_cast %19 : vector<24x1xf32> to vector<1x24x1xf32>
    tpu.vector_store %arg5[%c0_10, %c24, %c0_11], %22 {strides = array<i32>} : memref<1x48x1xf32, #tpu.memory_space<vmem>>, vector<1x24x1xf32>,
    %23 = tpu.iota {dimensions = array<i32: 0>} : vector<128x2xi32>
    %24 = tpu.iota {dimensions = array<i32: 1>} : vector<128x2xi32>
    %c64_i32 = arith.constant 64 : i32
    %25 = vector.broadcast %c64_i32 : i32 to vector<128x2xi32>
    %26 = arith.muli %24, %25 : vector<128x2xi32>
    %27 = arith.cmpi sge, %23, %26 : vector<128x2xi32>
    %c1_i32 = arith.constant 1 : i32
    %28 = vector.broadcast %c1_i32 : i32 to vector<128x2xi32>
    %29 = arith.addi %24, %28 : vector<128x2xi32>
    %c64_i32_12 = arith.constant 64 : i32
    %30 = vector.broadcast %c64_i32_12 : i32 to vector<128x2xi32>
    %31 = arith.muli %29, %30 : vector<128x2xi32>
    %32 = arith.cmpi slt, %23, %31 : vector<128x2xi32>
    %33 = arith.andi %27, %32 : vector<128x2xi1>
    %cst_13 = arith.constant 1.562500e-02 : f32
    %cst_14 = arith.constant 0.000000e+00 : f32
    %34 = vector.broadcast %cst_13 : f32 to vector<128x2xf32>
    %35 = vector.broadcast %cst_14 : f32 to vector<128x2xf32>
    %36 = arith.select %33, %34, %35 : vector<128x2xi1>, vector<128x2xf32>
    %cst_15 = arith.constant dense<0.000000e+00> : vector<24x2xf32>
    %37 = tpu.matmul %11, %36, %cst_15 {dimension_numbers = #tpu.dot_dimension_numbers<[1], [0], [0], [1], [0, 0, 1, 1], [], []>, precision = #tpu.contract_precision<fp32>} : vector<24x128xf32>, vector<128x2xf32>, vector<24x2xf32> -> vector<24x2xf32>
    %c0_16 = arith.constant 0 : index
    %c0_17 = arith.constant 0 : index
    %c0_18 = arith.constant 0 : index
    %38 = vector.load %arg4[%c0_16, %c0_17, %c0_18] : memref<1x24x2xf32, #tpu.memory_space<vmem>>, vector<1x24x2xf32>
    %39 = vector.shape_cast %38 : vector<1x24x2xf32> to vector<24x2xf32>
    %40 = vector.shape_cast %37 : vector<24x2xf32> to vector<1x24x2xf32>
    tpu.vector_store %arg4[%c0_16, %c0_17, %c0_18], %40 {strides = array<i32>} : memref<1x24x2xf32, #tpu.memory_space<vmem>>, vector<1x24x2xf32>,
    return
  }
  func.func @transform_0(%arg0: i32) -> (i32, i32) {
    %c0_i32 = arith.constant 0 : i32
    %c0_i32_0 = arith.constant 0 : i32
    return %c0_i32, %arg0 : i32, i32
  }
  func.func @transform_1(%arg0: i32) -> (i32, i32) {
    %c0_i32 = arith.constant 0 : i32
    %c0_i32_0 = arith.constant 0 : i32
    %c0_i32_1 = arith.constant 0 : i32
    return %c0_i32, %c0_i32_0 : i32, i32
  }
  func.func @transform_2(%arg0: i32) -> (i32, i32) {
    %c0_i32 = arith.constant 0 : i32
    %c0_i32_0 = arith.constant 0 : i32
    %c0_i32_1 = arith.constant 0 : i32
    return %c0_i32, %c0_i32_0 : i32, i32
  }
  func.func @transform_3(%arg0: i32) -> (i32, i32, i32) {
    %c0_i32 = arith.constant 0 : i32
    %c0_i32_0 = arith.constant 0 : i32
    %c0_i32_1 = arith.constant 0 : i32
    return %arg0, %c0_i32, %c0_i32_0 : i32, i32, i32
  }
  func.func @transform_4(%arg0: i32) -> (i32, i32, i32) {
    %c0_i32 = arith.constant 0 : i32
    %c0_i32_0 = arith.constant 0 : i32
    %c0_i32_1 = arith.constant 0 : i32
    return %arg0, %c0_i32, %c0_i32_0 : i32, i32, i32
  }
}

</mosaic_0001>

<llo_original>
// kernel: tpu_custom_call.1
$region0: #{tpu_custom_call.1}
  #allocation0 [shape = 'u32[]', space=smem, size = 0x4, offset = 0x4, fixed_abs, tag = 'smem constant byte address 0x4 - core index']
  #allocation1 [shape = 'u32[144,128]{1,0:T(1,128)}', space=vmem, size = 0x12000, scoped, tag = 'internal scratch']
  %s0 = inlined_call_operand.hbm [shape: bf16[128,768], index: 0, kind: input, shape index: {}]
  %s1 = inlined_call_operand.vmem [shape: bf16[24,128], index: 1, kind: input, shape index: {}]
  %s2 = inlined_call_operand.vmem [shape: f32[24,1], index: 2, kind: input, shape index: {}]
  %s3 = inlined_call_operand.vmem [shape: f32[2,24,2], index: 3, kind: output, shape index: {0}]
  %s4 = inlined_call_operand.vmem [shape: f32[2,48,1], index: 4, kind: output, shape index: {1}]
  %5 = xla_tuple %s3, %s4
  %s6 = sld [smem:[#allocation0]]
  $region57: #{tpu_custom_call.1} parent=0
    _
  %s8 = ssub.s32 1, %s6
  %s9 = scalar_select 0, %s8, %s6
  $region1: #{tpu_custom_call.1} parent=0
    #allocation2 [shape = 'u8[196608]{0}', space=vmem, size = 0x30000, scoped, tag = 'input window, operand 0']
    #allocation3 [shape = 's32[2]{0}', space=sflag, size = 0x8, scoped, tag = 'scoped memory for tpu_custom_call.1']
    %10 = vsyncpa [#allocation3], 0
    %s11 = scalar_lea.sflag [#allocation3], 1
    %12 = vsyncpa %s11, 0
    loop: start=0, step=1, limit=4
    $region2: #{tpu_custom_call.1} parent=1 // loop_pre_header
      _
    $region3: #{tpu_custom_call.1} parent=1 // loop_header
      %s14 = sphi 0, %s18
      %p15 = scmp.ge.s32.totalorder %s14, 4
      %s24 = sphi 0, %s26
      %s27 = sphi 0, %s24
      %s28 = sphi 0, %s27
      %s44 = sphi 0, %s28
      %s48 = sphi 0, %s48
      %s50 = sphi 0, %s48
      %s51 = sphi 0, %s50
      %s65 = sphi 0, %s51
      %s69 = sphi 0, %s69
      %s71 = sphi 0, %s69
      %s72 = sphi 0, %s71
      %s86 = sphi 0, %s72
      %s92 = sphi 0, %s94
      %s95 = sphi 0, %s92
      %s96 = sphi 0, %s95
      %s112 = sphi 0, %s96
      %s118 = sphi 0, %s120
      %s121 = sphi 0, %s118
      %s122 = sphi 0, %s121
      %s138 = sphi 0, %s122
    $region4: #{tpu_custom_call.1} parent=1 // loop_header_branch
      %17 = sbr.rel (%p15) target = $region8
    $region5: #{tpu_custom_call.1} parent=1 // loop_body
      %s19 = ssub.s32 %s14, 1
      %s20 = ssub.s32 %s14, 2
      %s21 = sadd.s32 %s14, 1
      %s22 = ssub.s32 %s14, %s21
      %p23 = scmp.eq.s32.totalorder %s22, 0
      %s25 = sadd.s32 %s24, 1
      %s26 = scalar_select %p23, %s24, %s25
      %p29 = pneg %p23
      %p30 = scmp.eq.s32.totalorder %s14, 1
      %p31 = por %p29, %p30
      %p32 = scmp.ne.s32.totalorder %s24, %s27
      %p33 = scmp.eq.s32.totalorder %s14, 0
      %p34 = por %p32, %p33
      %p35 = scmp.ne.s32.totalorder %s24, %s27
      %p36 = scmp.eq.s32.totalorder %s19, 1
      %p37 = por %p35, %p36
      %p38 = scmp.ne.s32.totalorder %s27, %s28
      %p39 = scmp.eq.s32.totalorder %s19, 0
      %p40 = por %p38, %p39
      %p41 = scmp.ne.s32.totalorder %s27, %s28
      %p42 = scmp.eq.s32.totalorder %s20, 1
      %p43 = por %p41, %p42
      %p45 = scmp.ne.s32.totalorder %s28, %s44
      %p46 = scmp.eq.s32.totalorder %s20, 0
      %p47 = por %p45, %p46
      %s49 = sadd.s32 %s48, 1
      %p52 = scmp.eq.s32.totalorder %s14, 1
      %p53 = scmp.ne.s32.totalorder %s48, %s50
      %p54 = scmp.eq.s32.totalorder %s14, 0
      %p55 = por %p53, %p54
      %p56 = scmp.ne.s32.totalorder %s48, %s50
      %p57 = scmp.eq.s32.totalorder %s19, 1
      %p58 = por %p56, %p57
      %p59 = scmp.ne.s32.totalorder %s50, %s51
      %p60 = scmp.eq.s32.totalorder %s19, 0
      %p61 = por %p59, %p60
      %p62 = scmp.ne.s32.totalorder %s50, %s51
      %p63 = scmp.eq.s32.totalorder %s20, 1
      %p64 = por %p62, %p63
      %p66 = scmp.ne.s32.totalorder %s51, %s65
      %p67 = scmp.eq.s32.totalorder %s20, 0
      %p68 = por %p66, %p67
      %s70 = sadd.s32 %s69, 1
      %p73 = scmp.eq.s32.totalorder %s14, 1
      %p74 = scmp.ne.s32.totalorder %s69, %s71
      %p75 = scmp.eq.s32.totalorder %s14, 0
      %p76 = por %p74, %p75
      %p77 = scmp.ne.s32.totalorder %s69, %s71
      %p78 = scmp.eq.s32.totalorder %s19, 1
      %p79 = por %p77, %p78
      %p80 = scmp.ne.s32.totalorder %s71, %s72
      %p81 = scmp.eq.s32.totalorder %s19, 0
      %p82 = por %p80, %p81
      %p83 = scmp.ne.s32.totalorder %s71, %s72
      %p84 = scmp.eq.s32.totalorder %s20, 1
      %p85 = por %p83, %p84
      %p87 = scmp.ne.s32.totalorder %s72, %s86
      %p88 = scmp.eq.s32.totalorder %s20, 0
      %p89 = por %p87, %p88
      %s90 = ssub.s32 %s14, %s21
      %p91 = scmp.eq.s32.totalorder %s90, 0
      %s93 = sadd.s32 %s92, 1
      %s94 = scalar_select %p91, %s92, %s93
      %p97 = pneg %p91
      %p98 = scmp.eq.s32.totalorder %s14, 1
      %p99 = por %p97, %p98
      %p100 = scmp.ne.s32.totalorder %s92, %s95
      %p101 = scmp.eq.s32.totalorder %s14, 0
      %p102 = por %p100, %p101
      %p103 = scmp.ne.s32.totalorder %s92, %s95
      %p104 = scmp.eq.s32.totalorder %s19, 1
      %p105 = por %p103, %p104
      %p106 = scmp.ne.s32.totalorder %s95, %s96
      %p107 = scmp.eq.s32.totalorder %s19, 0
      %p108 = por %p106, %p107
      %p109 = scmp.ne.s32.totalorder %s95, %s96
      %p110 = scmp.eq.s32.totalorder %s20, 1
      %p111 = por %p109, %p110
      %p113 = scmp.ne.s32.totalorder %s96, %s112
      %p114 = scmp.eq.s32.totalorder %s20, 0
      %p115 = por %p113, %p114
      %s116 = ssub.s32 %s14, %s21
      %p117 = scmp.eq.s32.totalorder %s116, 0
      %s119 = sadd.s32 %s118, 1
      %s120 = scalar_select %p117, %s118, %s119
      %p123 = pneg %p117
      %p124 = scmp.eq.s32.totalorder %s14, 1
      %p125 = por %p123, %p124
      %p126 = scmp.ne.s32.totalorder %s118, %s121
      %p127 = scmp.eq.s32.totalorder %s14, 0
      %p128 = por %p126, %p127
      %p129 = scmp.ne.s32.totalorder %s118, %s121
      %p130 = scmp.eq.s32.totalorder %s19, 1
      %p131 = por %p129, %p130
      %p132 = scmp.ne.s32.totalorder %s121, %s122
      %p133 = scmp.eq.s32.totalorder %s19, 0
      %p134 = por %p132, %p133
      %p135 = scmp.ne.s32.totalorder %s121, %s122
      %p136 = scmp.eq.s32.totalorder %s20, 1
      %p137 = por %p135, %p136
      %p139 = scmp.ne.s32.totalorder %s122, %s138
      %p140 = scmp.eq.s32.totalorder %s20, 0
      %p141 = por %p139, %p140
      %p142 = scmp.le.s32.totalorder 1, %s14
      %p143 = scmp.lt.s32.totalorder %s14, 3
      %p144 = pnand %p142, %p143
      %p145 = pneg %p144
      // Predicated region
      $region9: #{tpu_custom_call.1} parent=5 // pred_check
        _
      $region10: #{tpu_custom_call.1} parent=5 // pred_check_branch
        %147 = sbr.rel (%p144) target = $region12
      $region11: #{tpu_custom_call.1} parent=5 // pred_region
        %s148 = ssub.s32 %s14, 1
        // Predicated region
        $region13: #{tpu_custom_call.1} parent=11 // pred_check
          %p149 = pneg %p61
        $region14: #{tpu_custom_call.1} parent=11 // pred_check_branch
          %151 = sbr.rel (%p149) target = $region16
        $region15: #{tpu_custom_call.1} parent=11 // pred_region
          _
        $region16: #{tpu_custom_call.1} parent=11 // pred_fallthru
          _
        // Predicated region
        $region17: #{tpu_custom_call.1} parent=11 // pred_check
          %p152 = pneg %p82
        $region18: #{tpu_custom_call.1} parent=11 // pred_check_branch
          %154 = sbr.rel (%p152) target = $region20
        $region19: #{tpu_custom_call.1} parent=11 // pred_region
          _
        $region20: #{tpu_custom_call.1} parent=11 // pred_fallthru
          _
      $region12: #{tpu_custom_call.1} parent=5 // pred_fallthru
        _
      %p155 = scmp.lt.s32.totalorder %s14, 2
      // Predicated region
      $region21: #{tpu_custom_call.1} parent=5 // pred_check
        %p156 = pneg %p155
      $region22: #{tpu_custom_call.1} parent=5 // pred_check_branch
        %158 = sbr.rel (%p156) target = $region24
      $region23: #{tpu_custom_call.1} parent=5 // pred_region
        // Predicated region
        $region25: #{tpu_custom_call.1} parent=23 // pred_check
          %p159 = pneg %p34
        $region26: #{tpu_custom_call.1} parent=23 // pred_check_branch
          %161 = sbr.rel (%p159) target = $region28
        $region27: #{tpu_custom_call.1} parent=23 // pred_region
          %s162 = sand.u32 %s24, 1
          %s163 = scalar_lea.sflag [#allocation3], %s162
          %s164 = sand.u32 %s24, 1
          %s165 = smul.addr %s164, 192
          %s166 = scalar_lea.vmem [#allocation2], %s165
          %s167 = smul.u32 3, %s14
          %s169 = ssub.s32 3072, 3072
          %170 = vsyncadd %s163, %s169
          %s171 = smul.addr %s167, 64
          %s172 = scalar_lea.hbm %s0, %s171
          %s173 = sshll.u32 %s166, 4
          %s174 = int_to_ptr.vmem [resolvable:$true] %s173
          %179 = dma.hbm_to_vmem [thread:$0]  %s172, 3072, %s174, %s163, 384, 192, 12
        $region28: #{tpu_custom_call.1} parent=23 // pred_fallthru
          _
      $region24: #{tpu_custom_call.1} parent=5 // pred_fallthru
        _
      %p180 = scmp.le.s32.totalorder 1, %s14
      %p181 = scmp.lt.s32.totalorder %s14, 3
      %p182 = pnand %p180, %p181
      %p183 = pneg %p182
      // Predicated region
      $region29: #{tpu_custom_call.1} parent=5 // pred_check
        _
      $region30: #{tpu_custom_call.1} parent=5 // pred_check_branch
        %185 = sbr.rel (%p182) target = $region32
      $region31: #{tpu_custom_call.1} parent=5 // pred_region
        %s186 = ssub.s32 %s14, 1
        %s187 = sand.u32 %s27, 1
        %s188 = scalar_lea.sflag [#allocation3], %s187
        %s189 = sand.u32 %s27, 1
        %s190 = smul.addr %s189, 192
        %s191 = scalar_lea.vmem [#allocation2], %s190
        // Predicated region
        $region33: #{tpu_custom_call.1} parent=31 // pred_check
          %p192 = pneg %p40
        $region34: #{tpu_custom_call.1} parent=31 // pred_check_branch
          %194 = sbr.rel (%p192) target = $region36
        $region35: #{tpu_custom_call.1} parent=31 // pred_region
          %195 = dma.done %s188, 3072
        $region36: #{tpu_custom_call.1} parent=31 // pred_fallthru
          _
        %s196 = sand.u32 %s27, 1
        %s197 = scalar_lea.sflag [#allocation3], %s196
        %s198 = sand.u32 %s27, 1
        %s199 = smul.addr %s198, 192
        %s200 = scalar_lea.vmem [#allocation2], %s199
        %p201 = pneg %p40
        %p202 = pneg %p37
        %p203 = pneg %p61
        %p204 = pneg %p58
        %p205 = pneg %p82
        %p206 = pneg %p79
        %p207 = pneg %p108
        %p208 = pneg %p105
        %p209 = scmp.lt.s32.totalorder %s19, 1
        %s210 = scalar_select %p209, %s19, 1
        %s211 = smul.addr %s210, 3
        %s212 = smul.addr %s211, 8
        %s213 = scalar_lea.vmem %s3, %s212
        %p214 = pneg %p134
        %p215 = pneg %p131
        %p216 = scmp.lt.s32.totalorder %s19, 1
        %s217 = scalar_select %p216, %s19, 1
        %s218 = smul.addr %s217, 6
        %s219 = smul.addr %s218, 8
        %s220 = scalar_lea.vmem %s4, %s219
        %s221 = smul.u32 3, %s19
        %p222 = scmp.lt.s32.totalorder %s19, 1
        %s223 = scalar_select %p222, %s19, 1
        %s224 = smul.addr %s223, 3
        %s225 = smul.addr %s224, 8
        %s226 = scalar_lea.vmem %s3, %s225
        %p227 = scmp.lt.s32.totalorder %s19, 1
        %s228 = scalar_select %p227, %s19, 1
        %s229 = smul.addr %s228, 6
        %s230 = smul.addr %s229, 8
        %s231 = scalar_lea.vmem %s4, %s230
        %v233 = vld [vmem:[%s1] sm:$0xf]
        %v234 = vld [vmem:[%s1 + $0x4] sm:$0xf]
        %v235 = vld [vmem:[%s1 + $0x8] sm:$0xf]
        %v236 = vld [vmem:[%s191] sm:$0xff]
        %v237 = vld [vmem:[%s191 + $0x8] sm:$0xf]
        %v238 = vld [vmem:[%s191 + $0xc] sm:$0xff]
        %v239 = vld [vmem:[%s191 + $0x14] sm:$0xf]
        %v240 = vld [vmem:[%s191 + $0x18] sm:$0xff]
        %v241 = vld [vmem:[%s191 + $0x20] sm:$0xf]
        %v242 = vld [vmem:[%s191 + $0x24] sm:$0xff]
        %v243 = vld [vmem:[%s191 + $0x2c] sm:$0xf]
        %v244 = vld [vmem:[%s191 + $0x30] sm:$0xff]
        %v245 = vld [vmem:[%s191 + $0x38] sm:$0xf]
        %v246 = vld [vmem:[%s191 + $0x3c] sm:$0xff]
        %v247 = vld [vmem:[%s191 + $0x44] sm:$0xf]
        %v248 = vld [vmem:[%s191 + $0x48] sm:$0xff]
        %v249 = vld [vmem:[%s191 + $0x50] sm:$0xf]
        %v250 = vld [vmem:[%s191 + $0x54] sm:$0xff]
        %v251 = vld [vmem:[%s191 + $0x5c] sm:$0xf]
        %v252 = vld [vmem:[%s191 + $0x60] sm:$0xff]
        %v253 = vld [vmem:[%s191 + $0x68] sm:$0xf]
        %v254 = vld [vmem:[%s191 + $0x6c] sm:$0xff]
        %v255 = vld [vmem:[%s191 + $0x74] sm:$0xf]
        %v256 = vld [vmem:[%s191 + $0x78] sm:$0xff]
        %v257 = vld [vmem:[%s191 + $0x80] sm:$0xf]
        %v258 = vld [vmem:[%s191 + $0x84] sm:$0xff]
        %v259 = vld [vmem:[%s191 + $0x8c] sm:$0xf]
        %v260 = vld [vmem:[%s191 + $0x90] sm:$0xff]
        %v261 = vld [vmem:[%s191 + $0x98] sm:$0xf]
        %v262 = vld [vmem:[%s191 + $0x9c] sm:$0xff]
        %v263 = vld [vmem:[%s191 + $0xa4] sm:$0xf]
        %v264 = vld [vmem:[%s191 + $0xa8] sm:$0xff]
        %v265 = vld [vmem:[%s191 + $0xb0] sm:$0xf]
        %v266 = vld [vmem:[%s191 + $0xb4] sm:$0xff]
        %v267 = vld [vmem:[%s191 + $0xbc] sm:$0xf]
        %v271 = vunpack.c.l.b16 %v233
        %v272 = vunpack.c.l.b16 %v234
        %v273 = vunpack.c.l.b16 %v235
        %v274 = vpack.c.b16 %v272, %v271
        %v275 = vpack.c.b16 %v273, %v273
        %v310 = vunpack.c.l.b16 %v236
        %v311 = vunpack.c.h.b16 %v236
        %v312 = vunpack.c.l.b16 %v237
        %v313 = vunpack.c.l.b16 %v238
        %v314 = vunpack.c.h.b16 %v238
        %v315 = vunpack.c.l.b16 %v239
        %v316 = vunpack.c.l.b16 %v240
        %v317 = vunpack.c.h.b16 %v240
        %v318 = vunpack.c.l.b16 %v241
        %v319 = vunpack.c.l.b16 %v242
        %v320 = vunpack.c.h.b16 %v242
        %v321 = vunpack.c.l.b16 %v243
        %v322 = vunpack.c.l.b16 %v244
        %v323 = vunpack.c.h.b16 %v244
        %v324 = vunpack.c.l.b16 %v245
        %v325 = vunpack.c.l.b16 %v246
        %v326 = vunpack.c.h.b16 %v246
        %v327 = vunpack.c.l.b16 %v247
        %v328 = vunpack.c.l.b16 %v248
        %v329 = vunpack.c.h.b16 %v248
        %v330 = vunpack.c.l.b16 %v249
        %v331 = vunpack.c.l.b16 %v250
        %v332 = vunpack.c.h.b16 %v250
        %v333 = vunpack.c.l.b16 %v251
        %v334 = vunpack.c.l.b16 %v252
        %v335 = vunpack.c.h.b16 %v252
        %v336 = vunpack.c.l.b16 %v253
        %v337 = vunpack.c.l.b16 %v254
        %v338 = vunpack.c.h.b16 %v254
        %v339 = vunpack.c.l.b16 %v255
        %v340 = vunpack.c.l.b16 %v256
        %v341 = vunpack.c.h.b16 %v256
        %v342 = vunpack.c.l.b16 %v257
        %v343 = vunpack.c.l.b16 %v258
        %v344 = vunpack.c.h.b16 %v258
        %v345 = vunpack.c.l.b16 %v259
        %v346 = vunpack.c.l.b16 %v260
        %v347 = vunpack.c.h.b16 %v260
        %v348 = vunpack.c.l.b16 %v261
        %v349 = vunpack.c.l.b16 %v262
        %v350 = vunpack.c.h.b16 %v262
        %v351 = vunpack.c.l.b16 %v263
        %v352 = vunpack.c.l.b16 %v264
        %v353 = vunpack.c.h.b16 %v264
        %v354 = vunpack.c.l.b16 %v265
        %v355 = vunpack.c.l.b16 %v266
        %v356 = vunpack.c.h.b16 %v266
        %v357 = vunpack.c.l.b16 %v267
        %v358 = vpack.c.b16 %v313, %v310
        %v359 = vpack.c.b16 %v314, %v311
        %v360 = vpack.c.b16 %v315, %v312
        %v361 = vpack.c.b16 %v319, %v316
        %v362 = vpack.c.b16 %v320, %v317
        %v363 = vpack.c.b16 %v321, %v318
        %v364 = vpack.c.b16 %v325, %v322
        %v365 = vpack.c.b16 %v326, %v323
        %v366 = vpack.c.b16 %v327, %v324
        %v367 = vpack.c.b16 %v331, %v328
        %v368 = vpack.c.b16 %v332, %v329
        %v369 = vpack.c.b16 %v333, %v330
        %v370 = vpack.c.b16 %v337, %v334
        %v371 = vpack.c.b16 %v338, %v335
        %v372 = vpack.c.b16 %v339, %v336
        %v373 = vpack.c.b16 %v343, %v340
        %v374 = vpack.c.b16 %v344, %v341
        %v375 = vpack.c.b16 %v345, %v342
        %v376 = vpack.c.b16 %v349, %v346
        %v377 = vpack.c.b16 %v350, %v347
        %v378 = vpack.c.b16 %v351, %v348
        %v379 = vpack.c.b16 %v355, %v352
        %v380 = vpack.c.b16 %v356, %v353
        %v381 = vpack.c.b16 %v357, %v354
        %406 = vmatprep.subr.bf16.mxu0 %v359
        %407 = vmatpush1.bf16.msra.mxu0 %v358
        %408 = vmatprep.subr.bf16.mxu0 %v362
        %409 = vmatpush1.bf16.msra.mxu0 %v361
        %410 = vmatprep.subr.bf16.mxu0 %v365
        %411 = vmatpush1.bf16.msra.mxu0 %v364
        %412 = vmatprep.subr.bf16.mxu0 %v368
        %413 = vmatpush1.bf16.msra.mxu0 %v367
        %414 = vmatprep.subr.bf16.mxu0 %v371
        %415 = vmatpush1.bf16.msra.mxu0 %v370
        %416 = vmatprep.subr.bf16.mxu0 %v374
        %417 = vmatpush1.bf16.msra.mxu0 %v373
        %418 = vmatprep.subr.bf16.mxu0 %v377
        %419 = vmatpush1.bf16.msra.mxu0 %v376
        %420 = vmatprep.subr.bf16.mxu0 %v380
        %421 = vmatpush1.bf16.msra.mxu0 %v379
        %422 = vmatprep.subr.bf16.mxu0 0
        %423 = vmatpush1.bf16.msra.mxu0 0
        %424 = vmatprep.subr.bf16.mxu0 0
        %425 = vmatpush1.bf16.msra.mxu0 0
        %426 = vmatprep.subr.bf16.mxu0 0
        %427 = vmatpush1.bf16.msra.mxu0 0
        %428 = vmatprep.subr.bf16.mxu0 0
        %429 = vmatpush1.bf16.msra.mxu0 0
        %430 = vmatprep.subr.bf16.mxu0 0
        %431 = vmatpush1.bf16.msra.mxu0 0
        %432 = vmatprep.subr.bf16.mxu0 0
        %433 = vmatpush1.bf16.msra.mxu0 0
        %434 = vmatprep.subr.bf16.mxu0 0
        %435 = vmatpush1.bf16.msra.mxu0 0
        %436 = vmatprep.subr.bf16.mxu0 0
        %437 = vmatpush1.bf16.msra.mxu0 0
        %438 = vmatprep.mubr.bf16.mxu0 0
        %439 = vmatmul.mubr.bf16.gmra.mrb[0].mxu0 %v274
        %v440 = vpop.f32.mrb[0].mxu0
        %v441 = vadd.f32 0.0, %v440
        %v442 = vpop.f32.mrb[0].mxu0
        %v443 = vadd.f32 0.0, %v442
        %v444 = vpop.f32.mrb[0].mxu0
        %v445 = vadd.f32 0.0, %v444
        %v446 = vpop.f32.mrb[0].mxu0
        %v447 = vadd.f32 0.0, %v446
        %448 = vmatprep.mubr.bf16.mxu0 0
        %449 = vmatmul.mubr.bf16.gmra.mrb[0].mxu0 %v275
        %v450 = vpop.f32.mrb[0].mxu0
        %v451 = vadd.f32 0.0, %v450
        %v452 = vpop.f32.mrb[0].mxu0
        %v453 = vadd.f32 0.0, %v452
        %v454 = vpop.f32.mrb[0].mxu0
        %v455 = vpop.f32.mrb[0].mxu0
        %456 = vdwg.mxu0
        %457 = vmatprep.subr.bf16.mxu0 0
        %458 = vmatpush1.bf16.msra.mxu0 %v360
        %459 = vmatprep.subr.bf16.mxu0 0
        %460 = vmatpush1.bf16.msra.mxu0 %v363
        %461 = vmatprep.subr.bf16.mxu0 0
        %462 = vmatpush1.bf16.msra.mxu0 %v366
        %463 = vmatprep.subr.bf16.mxu0 0
        %464 = vmatpush1.bf16.msra.mxu0 %v369
        %465 = vmatprep.subr.bf16.mxu0 0
        %466 = vmatpush1.bf16.msra.mxu0 %v372
        %467 = vmatprep.subr.bf16.mxu0 0
        %468 = vmatpush1.bf16.msra.mxu0 %v375
        %469 = vmatprep.subr.bf16.mxu0 0
        %470 = vmatpush1.bf16.msra.mxu0 %v378
        %471 = vmatprep.subr.bf16.mxu0 0
        %472 = vmatpush1.bf16.msra.mxu0 %v381
        %473 = vmatprep.subr.bf16.mxu0 0
        %474 = vmatpush1.bf16.msra.mxu0 0
        %475 = vmatprep.subr.bf16.mxu0 0
        %476 = vmatpush1.bf16.msra.mxu0 0
        %477 = vmatprep.subr.bf16.mxu0 0
        %478 = vmatpush1.bf16.msra.mxu0 0
        %479 = vmatprep.subr.bf16.mxu0 0
        %480 = vmatpush1.bf16.msra.mxu0 0
        %481 = vmatprep.subr.bf16.mxu0 0
        %482 = vmatpush1.bf16.msra.mxu0 0
        %483 = vmatprep.subr.bf16.mxu0 0
        %484 = vmatpush1.bf16.msra.mxu0 0
        %485 = vmatprep.subr.bf16.mxu0 0
        %486 = vmatpush1.bf16.msra.mxu0 0
        %487 = vmatprep.subr.bf16.mxu0 0
        %488 = vmatpush1.bf16.msra.mxu0 0
        %489 = vmatprep.mubr.bf16.mxu0 0
        %490 = vmatmul.mubr.bf16.gmra.mrb[0].mxu0 %v274
        %v491 = vpop.f32.mrb[0].mxu0
        %v492 = vadd.f32 0.0, %v491
        %v493 = vpop.f32.mrb[0].mxu0
        %v494 = vpop.f32.mrb[0].mxu0
        %v495 = vadd.f32 0.0, %v494
        %v496 = vpop.f32.mrb[0].mxu0
        %497 = vmatprep.mubr.bf16.mxu0 0
        %498 = vmatmul.mubr.bf16.gmra.mrb[0].mxu0 %v275
        %v499 = vpop.f32.mrb[0].mxu0
        %v500 = vadd.f32 0.0, %v499
        %v501 = vpop.f32.mrb[0].mxu0
        %v502 = vpop.f32.mrb[0].mxu0
        %v503 = vpop.f32.mrb[0].mxu0
        %504 = vdwg.mxu0
        %v505 = vmax.f32 %v441, %v443
        %v506 = vmax.f32 %v445, %v447
        %v507 = vmax.f32 %v451, %v453
        %v508 = vmax.f32 %v505, %v492
        %v509 = vmax.f32 %v506, %v495
        %v510 = vmax.f32 %v507, %v500
        %v511 = vld [vmem:[%s2] sm:$0xff]
        %v512 = vld [vmem:[%s2 + $0x8] sm:$0xff]
        %v513 = vld [vmem:[%s2 + $0x10] sm:$0xff]
        %515 = vset.pattern.permute.xlu0 0
        %516 = vperm.xlu0 %515, %v511
        %v517 = vpop.permute.xlu0 %516
        %520 = vset.pattern.permute.xlu0 0
        %521 = vperm.xlu0 %520, %v512
        %v522 = vpop.permute.xlu0 %521
        %525 = vset.pattern.permute.xlu0 0
        %526 = vperm.xlu0 %525, %v513
        %v527 = vpop.permute.xlu0 %526
        %v529 = vadd.f32 %v508, %v517
        %v530 = vadd.f32 %v509, %v522
        %v531 = vadd.f32 %v510, %v527
        %v532 = vmul.f32 %v529, 1.442695
        %v533 = vpow.pop %v532
        %v534 = vmul.f32 %v530, 1.442695
        %v535 = vpow.pop %v534
        %v536 = vmul.f32 %v531, 1.442695
        %v537 = vpow.pop %v536
        %538 = vadd.xlane.f32.xlu0 %v533
        %v539 = vpop.xlane.xlu0 %538
        %540 = vadd.xlane.f32.xlu0 %v535
        %v541 = vpop.xlane.xlu0 %540
        %542 = vadd.xlane.f32.xlu0 %v537
        %v543 = vpop.xlane.xlu0 %542
        %vm544 = vcmask 7168
        %545 = vst.msk [vmem:[%s231] sm:$0xff] %vm544, %v539
        %546 = vst.msk [vmem:[%s231 + $0x8] sm:$0xff] %vm544, %v541
        %547 = vst.msk [vmem:[%s231 + $0x10] sm:$0xff] %vm544, %v543
        %v548 = vmul.f32 %v533, %v533
        %v549 = vmul.f32 %v535, %v535
        %v550 = vmul.f32 %v537, %v537
        %551 = vadd.xlane.f32.xlu0 %v548
        %v552 = vpop.xlane.xlu0 %551
        %553 = vadd.xlane.f32.xlu0 %v549
        %v554 = vpop.xlane.xlu0 %553
        %555 = vadd.xlane.f32.xlu0 %v550
        %v556 = vpop.xlane.xlu0 %555
        %557 = vst.msk [vmem:[%s231 + $0x18] sm:$0xff] %vm544, %v552
        %558 = vst.msk [vmem:[%s231 + $0x20] sm:$0xff] %vm544, %v554
        %559 = vst.msk [vmem:[%s231 + $0x28] sm:$0xff] %vm544, %v556
        %v560 = vlaneseq
        %v561 = vshrl.u32 %v560, 7
        %v562 = vadd.s32 %v561, 8
        %v563 = vadd.s32 %v561, 16
        %v564 = vadd.s32 %v561, 24
        %v565 = vadd.s32 %v561, 32
        %v566 = vadd.s32 %v561, 40
        %v567 = vadd.s32 %v561, 48
        %v568 = vadd.s32 %v561, 56
        %v569 = vadd.s32 %v561, 64
        %v570 = vadd.s32 %v561, 72
        %v571 = vadd.s32 %v561, 80
        %v572 = vadd.s32 %v561, 88
        %v573 = vadd.s32 %v561, 96
        %v574 = vadd.s32 %v561, 104
        %v575 = vadd.s32 %v561, 112
        %v576 = vadd.s32 %v561, 120
        %v577 = vlaneseq
        %v578 = vand.u32 %v577, 127
        %v579 = vmul.u32 %v578, 64
        %vm580 = vcmp.ge.s32.totalorder %v561, %v579
        %vm581 = vcmp.ge.s32.totalorder %v562, %v579
        %vm582 = vcmp.ge.s32.totalorder %v563, %v579
        %vm583 = vcmp.ge.s32.totalorder %v564, %v579
        %vm584 = vcmp.ge.s32.totalorder %v565, %v579
        %vm585 = vcmp.ge.s32.totalorder %v566, %v579
        %vm586 = vcmp.ge.s32.totalorder %v567, %v579
        %vm587 = vcmp.ge.s32.totalorder %v568, %v579
        %vm588 = vcmp.ge.s32.totalorder %v569, %v579
        %vm589 = vcmp.ge.s32.totalorder %v570, %v579
        %vm590 = vcmp.ge.s32.totalorder %v571, %v579
        %vm591 = vcmp.ge.s32.totalorder %v572, %v579
        %vm592 = vcmp.ge.s32.totalorder %v573, %v579
        %vm593 = vcmp.ge.s32.totalorder %v574, %v579
        %vm594 = vcmp.ge.s32.totalorder %v575, %v579
        %vm595 = vcmp.ge.s32.totalorder %v576, %v579
        %v596 = vadd.s32 %v578, 1
        %v597 = vmul.u32 %v596, 64
        %vm598 = vcmp.lt.s32.totalorder %v561, %v597
        %vm599 = vcmp.lt.s32.totalorder %v562, %v597
        %vm600 = vcmp.lt.s32.totalorder %v563, %v597
        %vm601 = vcmp.lt.s32.totalorder %v564, %v597
        %vm602 = vcmp.lt.s32.totalorder %v565, %v597
        %vm603 = vcmp.lt.s32.totalorder %v566, %v597
        %vm604 = vcmp.lt.s32.totalorder %v567, %v597
        %vm605 = vcmp.lt.s32.totalorder %v568, %v597
        %vm606 = vcmp.lt.s32.totalorder %v569, %v597
        %vm607 = vcmp.lt.s32.totalorder %v570, %v597
        %vm608 = vcmp.lt.s32.totalorder %v571, %v597
        %vm609 = vcmp.lt.s32.totalorder %v572, %v597
        %vm610 = vcmp.lt.s32.totalorder %v573, %v597
        %vm611 = vcmp.lt.s32.totalorder %v574, %v597
        %vm612 = vcmp.lt.s32.totalorder %v575, %v597
        %vm613 = vcmp.lt.s32.totalorder %v576, %v597
        %vm614 = vmand %vm580, %vm598
        %vm615 = vmand %vm581, %vm599
        %vm616 = vmand %vm582, %vm600
        %vm617 = vmand %vm583, %vm601
        %vm618 = vmand %vm584, %vm602
        %vm619 = vmand %vm585, %vm603
        %vm620 = vmand %vm586, %vm604
        %vm621 = vmand %vm587, %vm605
        %vm622 = vmand %vm588, %vm606
        %vm623 = vmand %vm589, %vm607
        %vm624 = vmand %vm590, %vm608
        %vm625 = vmand %vm591, %vm609
        %vm626 = vmand %vm592, %vm610
        %vm627 = vmand %vm593, %vm611
        %vm628 = vmand %vm594, %vm612
        %vm629 = vmand %vm595, %vm613
        %v630 = vsel %vm614, 0.015625, 0.0
        %v631 = vsel %vm615, 0.015625, 0.0
        %v632 = vsel %vm616, 0.015625, 0.0
        %v633 = vsel %vm617, 0.015625, 0.0
        %v634 = vsel %vm618, 0.015625, 0.0
        %v635 = vsel %vm619, 0.015625, 0.0
        %v636 = vsel %vm620, 0.015625, 0.0
        %v637 = vsel %vm621, 0.015625, 0.0
        %v638 = vsel %vm622, 0.015625, 0.0
        %v639 = vsel %vm623, 0.015625, 0.0
        %v640 = vsel %vm624, 0.015625, 0.0
        %v641 = vsel %vm625, 0.015625, 0.0
        %v642 = vsel %vm626, 0.015625, 0.0
        %v643 = vsel %vm627, 0.015625, 0.0
        %v644 = vsel %vm628, 0.015625, 0.0
        %v645 = vsel %vm629, 0.015625, 0.0
        %646 = vmatprep.subr.mxu0 0.0
        %647 = vmatpush1.msra.mxu0 %v630
        %648 = vmatprep.subr.mxu0 0.0
        %649 = vmatpush1.msra.mxu0 %v631
        %650 = vmatprep.subr.mxu0 0.0
        %651 = vmatpush1.msra.mxu0 %v632
        %652 = vmatprep.subr.mxu0 0.0
        %653 = vmatpush1.msra.mxu0 %v633
        %654 = vmatprep.subr.mxu0 0.0
        %655 = vmatpush1.msra.mxu0 %v634
        %656 = vmatprep.subr.mxu0 0.0
        %657 = vmatpush1.msra.mxu0 %v635
        %658 = vmatprep.subr.mxu0 0.0
        %659 = vmatpush1.msra.mxu0 %v636
        %660 = vmatprep.subr.mxu0 0.0
        %661 = vmatpush1.msra.mxu0 %v637
        %662 = vmatprep.subr.mxu0 0.0
        %663 = vmatpush1.msra.mxu0 %v638
        %664 = vmatprep.subr.mxu0 0.0
        %665 = vmatpush1.msra.mxu0 %v639
        %666 = vmatprep.subr.mxu0 0.0
        %667 = vmatpush1.msra.mxu0 %v640
        %668 = vmatprep.subr.mxu0 0.0
        %669 = vmatpush1.msra.mxu0 %v641
        %670 = vmatprep.subr.mxu0 0.0
        %671 = vmatpush1.msra.mxu0 %v642
        %672 = vmatprep.subr.mxu0 0.0
        %673 = vmatpush1.msra.mxu0 %v643
        %674 = vmatprep.subr.mxu0 0.0
        %675 = vmatpush1.msra.mxu0 %v644
        %676 = vmatprep.subr.mxu0 0.0
        %677 = vmatpush1.msra.mxu0 %v645
        %678 = vmatprep.subr.mxu0 0.0
        %679 = vmatpush1.msra.mxu0 0.0
        %680 = vmatprep.subr.mxu0 0.0
        %681 = vmatpush1.msra.mxu0 0.0
        %682 = vmatprep.subr.mxu0 0.0
        %683 = vmatpush1.msra.mxu0 0.0
        %684 = vmatprep.subr.mxu0 0.0
        %685 = vmatpush1.msra.mxu0 0.0
        %686 = vmatprep.subr.mxu0 0.0
        %687 = vmatpush1.msra.mxu0 0.0
        %688 = vmatprep.subr.mxu0 0.0
        %689 = vmatpush1.msra.mxu0 0.0
        %690 = vmatprep.subr.mxu0 0.0
        %691 = vmatpush1.msra.mxu0 0.0
        %692 = vmatprep.subr.mxu0 0.0
        %693 = vmatpush1.msra.mxu0 0.0
        %694 = vmatprep.subr.mxu0 0.0
        %695 = vmatpush1.msra.mxu0 0.0
        %696 = vmatprep.subr.mxu0 0.0
        %697 = vmatpush1.msra.mxu0 0.0
        %698 = vmatprep.subr.mxu0 0.0
        %699 = vmatpush1.msra.mxu0 0.0
        %700 = vmatprep.subr.mxu0 0.0
        %701 = vmatpush1.msra.mxu0 0.0
        %702 = vmatprep.subr.mxu0 0.0
        %703 = vmatpush1.msra.mxu0 0.0
        %704 = vmatprep.subr.mxu0 0.0
        %705 = vmatpush1.msra.mxu0 0.0
        %706 = vmatprep.subr.mxu0 0.0
        %707 = vmatpush1.msra.mxu0 0.0
        %708 = vmatprep.subr.mxu0 0.0
        %709 = vmatpush1.msra.mxu0 0.0
        %710 = vmatprep.mubr.f32.mxu0 0.0
        %v711 = vand.u32 %v533, 4294901760
        %v712 = vsub.f32 %v533, %v711
        %v713 = vand.u32 %v712, 4294901760
        %v714 = vsub.f32 %v712, %v713
        %v715 = vand.u32 %v714, 4294901760
        %716 = vmatmul.mubr.f32.gmra.mrb[0].mxu0 %v715
        %v717 = vpop.f32.mrb[0].mxu0
        %v718 = vadd.f32 0.0, %v717
        %v719 = vpop.f32.mrb[0].mxu0
        %720 = vmatprep.mubr.f32.mxu0 0.0
        %v721 = vand.u32 %v535, 4294901760
        %v722 = vsub.f32 %v535, %v721
        %v723 = vand.u32 %v722, 4294901760
        %v724 = vsub.f32 %v722, %v723
        %v725 = vand.u32 %v724, 4294901760
        %726 = vmatmul.mubr.f32.gmra.mrb[0].mxu0 %v725
        %v727 = vpop.f32.mrb[0].mxu0
        %v728 = vadd.f32 0.0, %v727
        %v729 = vpop.f32.mrb[0].mxu0
        %730 = vmatprep.mubr.f32.mxu0 0.0
        %v731 = vand.u32 %v537, 4294901760
        %v732 = vsub.f32 %v537, %v731
        %v733 = vand.u32 %v732, 4294901760
        %v734 = vsub.f32 %v732, %v733
        %v735 = vand.u32 %v734, 4294901760
        %736 = vmatmul.mubr.f32.gmra.mrb[0].mxu0 %v735
        %v737 = vpop.f32.mrb[0].mxu0
        %v738 = vadd.f32 0.0, %v737
        %v739 = vpop.f32.mrb[0].mxu0
        %740 = vdwg.mxu0
        %741 = vmatprep.subr.mxu0 0.0
        %v742 = vsub.f32 %v630, %v630
        %v743 = vand.u32 %v742, 4294901760
        %v744 = vsub.f32 %v742, %v743
        %v745 = vand.u32 %v744, 4294901760
        %746 = vmatpush1.msra.mxu0 %v745
        %747 = vmatprep.subr.mxu0 0.0
        %v748 = vsub.f32 %v631, %v631
        %v749 = vand.u32 %v748, 4294901760
        %v750 = vsub.f32 %v748, %v749
        %v751 = vand.u32 %v750, 4294901760
        %752 = vmatpush1.msra.mxu0 %v751
        %753 = vmatprep.subr.mxu0 0.0
        %v754 = vsub.f32 %v632, %v632
        %v755 = vand.u32 %v754, 4294901760
        %v756 = vsub.f32 %v754, %v755
        %v757 = vand.u32 %v756, 4294901760
        %758 = vmatpush1.msra.mxu0 %v757
        %759 = vmatprep.subr.mxu0 0.0
        %v760 = vsub.f32 %v633, %v633
        %v761 = vand.u32 %v760, 4294901760
        %v762 = vsub.f32 %v760, %v761
        %v763 = vand.u32 %v762, 4294901760
        %764 = vmatpush1.msra.mxu0 %v763
        %765 = vmatprep.subr.mxu0 0.0
        %v766 = vsub.f32 %v634, %v634
        %v767 = vand.u32 %v766, 4294901760
        %v768 = vsub.f32 %v766, %v767
        %v769 = vand.u32 %v768, 4294901760
        %770 = vmatpush1.msra.mxu0 %v769
        %771 = vmatprep.subr.mxu0 0.0
        %v772 = vsub.f32 %v635, %v635
        %v773 = vand.u32 %v772, 4294901760
        %v774 = vsub.f32 %v772, %v773
        %v775 = vand.u32 %v774, 4294901760
        %776 = vmatpush1.msra.mxu0 %v775
        %777 = vmatprep.subr.mxu0 0.0
        %v778 = vsub.f32 %v636, %v636
        %v779 = vand.u32 %v778, 4294901760
        %v780 = vsub.f32 %v778, %v779
        %v781 = vand.u32 %v780, 4294901760
        %782 = vmatpush1.msra.mxu0 %v781
        %783 = vmatprep.subr.mxu0 0.0
        %v784 = vsub.f32 %v637, %v637
        %v785 = vand.u32 %v784, 4294901760
        %v786 = vsub.f32 %v784, %v785
        %v787 = vand.u32 %v786, 4294901760
        %788 = vmatpush1.msra.mxu0 %v787
        %789 = vmatprep.subr.mxu0 0.0
        %v790 = vsub.f32 %v638, %v638
        %v791 = vand.u32 %v790, 4294901760
        %v792 = vsub.f32 %v790, %v791
        %v793 = vand.u32 %v792, 4294901760
        %794 = vmatpush1.msra.mxu0 %v793
        %795 = vmatprep.subr.mxu0 0.0
        %v796 = vsub.f32 %v639, %v639
        %v797 = vand.u32 %v796, 4294901760
        %v798 = vsub.f32 %v796, %v797
        %v799 = vand.u32 %v798, 4294901760
        %800 = vmatpush1.msra.mxu0 %v799
        %801 = vmatprep.subr.mxu0 0.0
        %v802 = vsub.f32 %v640, %v640
        %v803 = vand.u32 %v802, 4294901760
        %v804 = vsub.f32 %v802, %v803
        %v805 = vand.u32 %v804, 4294901760
        %806 = vmatpush1.msra.mxu0 %v805
        %807 = vmatprep.subr.mxu0 0.0
        %v808 = vsub.f32 %v641, %v641
        %v809 = vand.u32 %v808, 4294901760
        %v810 = vsub.f32 %v808, %v809
        %v811 = vand.u32 %v810, 4294901760
        %812 = vmatpush1.msra.mxu0 %v811
        %813 = vmatprep.subr.mxu0 0.0
        %v814 = vsub.f32 %v642, %v642
        %v815 = vand.u32 %v814, 4294901760
        %v816 = vsub.f32 %v814, %v815
        %v817 = vand.u32 %v816, 4294901760
        %818 = vmatpush1.msra.mxu0 %v817
        %819 = vmatprep.subr.mxu0 0.0
        %v820 = vsub.f32 %v643, %v643
        %v821 = vand.u32 %v820, 4294901760
        %v822 = vsub.f32 %v820, %v821
        %v823 = vand.u32 %v822, 4294901760
        %824 = vmatpush1.msra.mxu0 %v823
        %825 = vmatprep.subr.mxu0 0.0
        %v826 = vsub.f32 %v644, %v644
        %v827 = vand.u32 %v826, 4294901760
        %v828 = vsub.f32 %v826, %v827
        %v829 = vand.u32 %v828, 4294901760
        %830 = vmatpush1.msra.mxu0 %v829
        %831 = vmatprep.subr.mxu0 0.0
        %v832 = vsub.f32 %v645, %v645
        %v833 = vand.u32 %v832, 4294901760
        %v834 = vsub.f32 %v832, %v833
        %v835 = vand.u32 %v834, 4294901760
        %836 = vmatpush1.msra.mxu0 %v835
        %837 = vmatprep.subr.mxu0 0.0
        %838 = vmatpush1.msra.mxu0 0.0
        %839 = vmatprep.subr.mxu0 0.0
        %840 = vmatpush1.msra.mxu0 0.0
        %841 = vmatprep.subr.mxu0 0.0
        %842 = vmatpush1.msra.mxu0 0.0
        %843 = vmatprep.subr.mxu0 0.0
        %844 = vmatpush1.msra.mxu0 0.0
        %845 = vmatprep.subr.mxu0 0.0
        %846 = vmatpush1.msra.mxu0 0.0
        %847 = vmatprep.subr.mxu0 0.0
        %848 = vmatpush1.msra.mxu0 0.0
        %849 = vmatprep.subr.mxu0 0.0
        %850 = vmatpush1.msra.mxu0 0.0
        %851 = vmatprep.subr.mxu0 0.0
        %852 = vmatpush1.msra.mxu0 0.0
        %853 = vmatprep.subr.mxu0 0.0
        %854 = vmatpush1.msra.mxu0 0.0
        %855 = vmatprep.subr.mxu0 0.0
        %856 = vmatpush1.msra.mxu0 0.0
        %857 = vmatprep.subr.mxu0 0.0
        %858 = vmatpush1.msra.mxu0 0.0
        %859 = vmatprep.subr.mxu0 0.0
        %860 = vmatpush1.msra.mxu0 0.0
        %861 = vmatprep.subr.mxu0 0.0
        %862 = vmatpush1.msra.mxu0 0.0
        %863 = vmatprep.subr.mxu0 0.0
        %864 = vmatpush1.msra.mxu0 0.0
        %865 = vmatprep.subr.mxu0 0.0
        %866 = vmatpush1.msra.mxu0 0.0
        %867 = vmatprep.subr.mxu0 0.0
        %868 = vmatpush1.msra.mxu0 0.0
        %869 = vmatprep.mubr.f32.mxu0 0.0
        %v870 = vand.u32 %v533, 4294901760
        %871 = vmatmul.mubr.f32.gmra.mrb[0].mxu0 %v870
        %v872 = vpop.f32.mrb[0].mxu0
        %v873 = vadd.f32 %v718, %v872
        %v874 = vpop.f32.mrb[0].mxu0
        %875 = vmatprep.mubr.f32.mxu0 0.0
        %v876 = vand.u32 %v535, 4294901760
        %877 = vmatmul.mubr.f32.gmra.mrb[0].mxu0 %v876
        %v878 = vpop.f32.mrb[0].mxu0
        %v879 = vadd.f32 %v728, %v878
        %v880 = vpop.f32.mrb[0].mxu0
        %881 = vmatprep.mubr.f32.mxu0 0.0
        %v882 = vand.u32 %v537, 4294901760
        %883 = vmatmul.mubr.f32.gmra.mrb[0].mxu0 %v882
        %v884 = vpop.f32.mrb[0].mxu0
        %v885 = vadd.f32 %v738, %v884
        %v886 = vpop.f32.mrb[0].mxu0
        %887 = vdwg.mxu0
        %888 = vmatprep.subr.mxu0 0.0
        %v889 = vsub.f32 %v630, %v630
        %890 = vmatpush1.msra.mxu0 %v889
        %891 = vmatprep.subr.mxu0 0.0
        %v892 = vsub.f32 %v631, %v631
        %893 = vmatpush1.msra.mxu0 %v892
        %894 = vmatprep.subr.mxu0 0.0
        %v895 = vsub.f32 %v632, %v632
        %896 = vmatpush1.msra.mxu0 %v895
        %897 = vmatprep.subr.mxu0 0.0
        %v898 = vsub.f32 %v633, %v633
        %899 = vmatpush1.msra.mxu0 %v898
        %900 = vmatprep.subr.mxu0 0.0
        %v901 = vsub.f32 %v634, %v634
        %902 = vmatpush1.msra.mxu0 %v901
        %903 = vmatprep.subr.mxu0 0.0
        %v904 = vsub.f32 %v635, %v635
        %905 = vmatpush1.msra.mxu0 %v904
        %906 = vmatprep.subr.mxu0 0.0
        %v907 = vsub.f32 %v636, %v636
        %908 = vmatpush1.msra.mxu0 %v907
        %909 = vmatprep.subr.mxu0 0.0
        %v910 = vsub.f32 %v637, %v637
        %911 = vmatpush1.msra.mxu0 %v910
        %912 = vmatprep.subr.mxu0 0.0
        %v913 = vsub.f32 %v638, %v638
        %914 = vmatpush1.msra.mxu0 %v913
        %915 = vmatprep.subr.mxu0 0.0
        %v916 = vsub.f32 %v639, %v639
        %917 = vmatpush1.msra.mxu0 %v916
        %918 = vmatprep.subr.mxu0 0.0
        %v919 = vsub.f32 %v640, %v640
        %920 = vmatpush1.msra.mxu0 %v919
        %921 = vmatprep.subr.mxu0 0.0
        %v922 = vsub.f32 %v641, %v641
        %923 = vmatpush1.msra.mxu0 %v922
        %924 = vmatprep.subr.mxu0 0.0
        %v925 = vsub.f32 %v642, %v642
        %926 = vmatpush1.msra.mxu0 %v925
        %927 = vmatprep.subr.mxu0 0.0
        %v928 = vsub.f32 %v643, %v643
        %929 = vmatpush1.msra.mxu0 %v928
        %930 = vmatprep.subr.mxu0 0.0
        %v931 = vsub.f32 %v644, %v644
        %932 = vmatpush1.msra.mxu0 %v931
        %933 = vmatprep.subr.mxu0 0.0
        %v934 = vsub.f32 %v645, %v645
        %935 = vmatpush1.msra.mxu0 %v934
        %936 = vmatprep.subr.mxu0 0.0
        %937 = vmatpush1.msra.mxu0 0.0
        %938 = vmatprep.subr.mxu0 0.0
        %939 = vmatpush1.msra.mxu0 0.0
        %940 = vmatprep.subr.mxu0 0.0
        %941 = vmatpush1.msra.mxu0 0.0
        %942 = vmatprep.subr.mxu0 0.0
        %943 = vmatpush1.msra.mxu0 0.0
        %944 = vmatprep.subr.mxu0 0.0
        %945 = vmatpush1.msra.mxu0 0.0
        %946 = vmatprep.subr.mxu0 0.0
        %947 = vmatpush1.msra.mxu0 0.0
        %948 = vmatprep.subr.mxu0 0.0
        %949 = vmatpush1.msra.mxu0 0.0
        %950 = vmatprep.subr.mxu0 0.0
        %951 = vmatpush1.msra.mxu0 0.0
        %952 = vmatprep.subr.mxu0 0.0
        %953 = vmatpush1.msra.mxu0 0.0
        %954 = vmatprep.subr.mxu0 0.0
        %955 = vmatpush1.msra.mxu0 0.0
        %956 = vmatprep.subr.mxu0 0.0
        %957 = vmatpush1.msra.mxu0 0.0
        %958 = vmatprep.subr.mxu0 0.0
        %959 = vmatpush1.msra.mxu0 0.0
        %960 = vmatprep.subr.mxu0 0.0
        %961 = vmatpush1.msra.mxu0 0.0
        %962 = vmatprep.subr.mxu0 0.0
        %963 = vmatpush1.msra.mxu0 0.0
        %964 = vmatprep.subr.mxu0 0.0
        %965 = vmatpush1.msra.mxu0 0.0
        %966 = vmatprep.subr.mxu0 0.0
        %967 = vmatpush1.msra.mxu0 0.0
        %968 = vmatprep.mubr.f32.mxu0 0.0
        %v969 = vand.u32 %v533, 4294901760
        %v970 = vsub.f32 %v533, %v969
        %971 = vmatmul.mubr.f32.gmra.mrb[0].mxu0 %v970
        %v972 = vpop.f32.mrb[0].mxu0
        %v973 = vadd.f32 %v873, %v972
        %v974 = vpop.f32.mrb[0].mxu0
        %975 = vmatprep.mubr.f32.mxu0 0.0
        %v976 = vand.u32 %v535, 4294901760
        %v977 = vsub.f32 %v535, %v976
        %978 = vmatmul.mubr.f32.gmra.mrb[0].mxu0 %v977
        %v979 = vpop.f32.mrb[0].mxu0
        %v980 = vadd.f32 %v879, %v979
        %v981 = vpop.f32.mrb[0].mxu0
        %982 = vmatprep.mubr.f32.mxu0 0.0
        %v983 = vand.u32 %v537, 4294901760
        %v984 = vsub.f32 %v537, %v983
        %985 = vmatmul.mubr.f32.gmra.mrb[0].mxu0 %v984
        %v986 = vpop.f32.mrb[0].mxu0
        %v987 = vadd.f32 %v885, %v986
        %v988 = vpop.f32.mrb[0].mxu0
        %989 = vdwg.mxu0
        %990 = vmatprep.subr.mxu0 0.0
        %991 = vmatpush1.msra.mxu0 %v630
        %992 = vmatprep.subr.mxu0 0.0
        %993 = vmatpush1.msra.mxu0 %v631
        %994 = vmatprep.subr.mxu0 0.0
        %995 = vmatpush1.msra.mxu0 %v632
        %996 = vmatprep.subr.mxu0 0.0
        %997 = vmatpush1.msra.mxu0 %v633
        %998 = vmatprep.subr.mxu0 0.0
        %999 = vmatpush1.msra.mxu0 %v634
        %1000 = vmatprep.subr.mxu0 0.0
        %1001 = vmatpush1.msra.mxu0 %v635
        %1002 = vmatprep.subr.mxu0 0.0
        %1003 = vmatpush1.msra.mxu0 %v636
        %1004 = vmatprep.subr.mxu0 0.0
        %1005 = vmatpush1.msra.mxu0 %v637
        %1006 = vmatprep.subr.mxu0 0.0
        %1007 = vmatpush1.msra.mxu0 %v638
        %1008 = vmatprep.subr.mxu0 0.0
        %1009 = vmatpush1.msra.mxu0 %v639
        %1010 = vmatprep.subr.mxu0 0.0
        %1011 = vmatpush1.msra.mxu0 %v640
        %1012 = vmatprep.subr.mxu0 0.0
        %1013 = vmatpush1.msra.mxu0 %v641
        %1014 = vmatprep.subr.mxu0 0.0
        %1015 = vmatpush1.msra.mxu0 %v642
        %1016 = vmatprep.subr.mxu0 0.0
        %1017 = vmatpush1.msra.mxu0 %v643
        %1018 = vmatprep.subr.mxu0 0.0
        %1019 = vmatpush1.msra.mxu0 %v644
        %1020 = vmatprep.subr.mxu0 0.0
        %1021 = vmatpush1.msra.mxu0 %v645
        %1022 = vmatprep.subr.mxu0 0.0
        %1023 = vmatpush1.msra.mxu0 0.0
        %1024 = vmatprep.subr.mxu0 0.0
        %1025 = vmatpush1.msra.mxu0 0.0
        %1026 = vmatprep.subr.mxu0 0.0
        %1027 = vmatpush1.msra.mxu0 0.0
        %1028 = vmatprep.subr.mxu0 0.0
        %1029 = vmatpush1.msra.mxu0 0.0
        %1030 = vmatprep.subr.mxu0 0.0
        %1031 = vmatpush1.msra.mxu0 0.0
        %1032 = vmatprep.subr.mxu0 0.0
        %1033 = vmatpush1.msra.mxu0 0.0
        %1034 = vmatprep.subr.mxu0 0.0
        %1035 = vmatpush1.msra.mxu0 0.0
        %1036 = vmatprep.subr.mxu0 0.0
        %1037 = vmatpush1.msra.mxu0 0.0
        %1038 = vmatprep.subr.mxu0 0.0
        %1039 = vmatpush1.msra.mxu0 0.0
        %1040 = vmatprep.subr.mxu0 0.0
        %1041 = vmatpush1.msra.mxu0 0.0
        %1042 = vmatprep.subr.mxu0 0.0
        %1043 = vmatpush1.msra.mxu0 0.0
        %1044 = vmatprep.subr.mxu0 0.0
        %1045 = vmatpush1.msra.mxu0 0.0
        %1046 = vmatprep.subr.mxu0 0.0
        %1047 = vmatpush1.msra.mxu0 0.0
        %1048 = vmatprep.subr.mxu0 0.0
        %1049 = vmatpush1.msra.mxu0 0.0
        %1050 = vmatprep.subr.mxu0 0.0
        %1051 = vmatpush1.msra.mxu0 0.0
        %1052 = vmatprep.subr.mxu0 0.0
        %1053 = vmatpush1.msra.mxu0 0.0
        %1054 = vmatprep.mubr.f32.mxu0 0.0
        %v1055 = vand.u32 %v533, 4294901760
        %v1056 = vsub.f32 %v533, %v1055
        %v1057 = vand.u32 %v1056, 4294901760
        %1058 = vmatmul.mubr.f32.gmra.mrb[0].mxu0 %v1057
        %v1059 = vpop.f32.mrb[0].mxu0
        %v1060 = vadd.f32 %v973, %v1059
        %v1061 = vpop.f32.mrb[0].mxu0
        %1062 = vmatprep.mubr.f32.mxu0 0.0
        %v1063 = vand.u32 %v535, 4294901760
        %v1064 = vsub.f32 %v535, %v1063
        %v1065 = vand.u32 %v1064, 4294901760
        %1066 = vmatmul.mubr.f32.gmra.mrb[0].mxu0 %v1065
        %v1067 = vpop.f32.mrb[0].mxu0
        %v1068 = vadd.f32 %v980, %v1067
        %v1069 = vpop.f32.mrb[0].mxu0
        %1070 = vmatprep.mubr.f32.mxu0 0.0
        %v1071 = vand.u32 %v537, 4294901760
        %v1072 = vsub.f32 %v537, %v1071
        %v1073 = vand.u32 %v1072, 4294901760
        %1074 = vmatmul.mubr.f32.gmra.mrb[0].mxu0 %v1073
        %v1075 = vpop.f32.mrb[0].mxu0
        %v1076 = vadd.f32 %v987, %v1075
        %v1077 = vpop.f32.mrb[0].mxu0
        %1078 = vdwg.mxu0
        %1079 = vmatprep.subr.mxu0 0.0
        %v1080 = vsub.f32 %v630, %v630
        %v1081 = vand.u32 %v1080, 4294901760
        %1082 = vmatpush1.msra.mxu0 %v1081
        %1083 = vmatprep.subr.mxu0 0.0
        %v1084 = vsub.f32 %v631, %v631
        %v1085 = vand.u32 %v1084, 4294901760
        %1086 = vmatpush1.msra.mxu0 %v1085
        %1087 = vmatprep.subr.mxu0 0.0
        %v1088 = vsub.f32 %v632, %v632
        %v1089 = vand.u32 %v1088, 4294901760
        %1090 = vmatpush1.msra.mxu0 %v1089
        %1091 = vmatprep.subr.mxu0 0.0
        %v1092 = vsub.f32 %v633, %v633
        %v1093 = vand.u32 %v1092, 4294901760
        %1094 = vmatpush1.msra.mxu0 %v1093
        %1095 = vmatprep.subr.mxu0 0.0
        %v1096 = vsub.f32 %v634, %v634
        %v1097 = vand.u32 %v1096, 4294901760
        %1098 = vmatpush1.msra.mxu0 %v1097
        %1099 = vmatprep.subr.mxu0 0.0
        %v1100 = vsub.f32 %v635, %v635
        %v1101 = vand.u32 %v1100, 4294901760
        %1102 = vmatpush1.msra.mxu0 %v1101
        %1103 = vmatprep.subr.mxu0 0.0
        %v1104 = vsub.f32 %v636, %v636
        %v1105 = vand.u32 %v1104, 4294901760
        %1106 = vmatpush1.msra.mxu0 %v1105
        %1107 = vmatprep.subr.mxu0 0.0
        %v1108 = vsub.f32 %v637, %v637
        %v1109 = vand.u32 %v1108, 4294901760
        %1110 = vmatpush1.msra.mxu0 %v1109
        %1111 = vmatprep.subr.mxu0 0.0
        %v1112 = vsub.f32 %v638, %v638
        %v1113 = vand.u32 %v1112, 4294901760
        %1114 = vmatpush1.msra.mxu0 %v1113
        %1115 = vmatprep.subr.mxu0 0.0
        %v1116 = vsub.f32 %v639, %v639
        %v1117 = vand.u32 %v1116, 4294901760
        %1118 = vmatpush1.msra.mxu0 %v1117
        %1119 = vmatprep.subr.mxu0 0.0
        %v1120 = vsub.f32 %v640, %v640
        %v1121 = vand.u32 %v1120, 4294901760
        %1122 = vmatpush1.msra.mxu0 %v1121
        %1123 = vmatprep.subr.mxu0 0.0
        %v1124 = vsub.f32 %v641, %v641
        %v1125 = vand.u32 %v1124, 4294901760
        %1126 = vmatpush1.msra.mxu0 %v1125
        %1127 = vmatprep.subr.mxu0 0.0
        %v1128 = vsub.f32 %v642, %v642
        %v1129 = vand.u32 %v1128, 4294901760
        %1130 = vmatpush1.msra.mxu0 %v1129
        %1131 = vmatprep.subr.mxu0 0.0
        %v1132 = vsub.f32 %v643, %v643
        %v1133 = vand.u32 %v1132, 4294901760
        %1134 = vmatpush1.msra.mxu0 %v1133
        %1135 = vmatprep.subr.mxu0 0.0
        %v1136 = vsub.f32 %v644, %v644
        %v1137 = vand.u32 %v1136, 4294901760
        %1138 = vmatpush1.msra.mxu0 %v1137
        %1139 = vmatprep.subr.mxu0 0.0
        %v1140 = vsub.f32 %v645, %v645
        %v1141 = vand.u32 %v1140, 4294901760
        %1142 = vmatpush1.msra.mxu0 %v1141
        %1143 = vmatprep.subr.mxu0 0.0
        %1144 = vmatpush1.msra.mxu0 0.0
        %1145 = vmatprep.subr.mxu0 0.0
        %1146 = vmatpush1.msra.mxu0 0.0
        %1147 = vmatprep.subr.mxu0 0.0
        %1148 = vmatpush1.msra.mxu0 0.0
        %1149 = vmatprep.subr.mxu0 0.0
        %1150 = vmatpush1.msra.mxu0 0.0
        %1151 = vmatprep.subr.mxu0 0.0
        %1152 = vmatpush1.msra.mxu0 0.0
        %1153 = vmatprep.subr.mxu0 0.0
        %1154 = vmatpush1.msra.mxu0 0.0
        %1155 = vmatprep.subr.mxu0 0.0
        %1156 = vmatpush1.msra.mxu0 0.0
        %1157 = vmatprep.subr.mxu0 0.0
        %1158 = vmatpush1.msra.mxu0 0.0
        %1159 = vmatprep.subr.mxu0 0.0
        %1160 = vmatpush1.msra.mxu0 0.0
        %1161 = vmatprep.subr.mxu0 0.0
        %1162 = vmatpush1.msra.mxu0 0.0
        %1163 = vmatprep.subr.mxu0 0.0
        %1164 = vmatpush1.msra.mxu0 0.0
        %1165 = vmatprep.subr.mxu0 0.0
        %1166 = vmatpush1.msra.mxu0 0.0
        %1167 = vmatprep.subr.mxu0 0.0
        %1168 = vmatpush1.msra.mxu0 0.0
        %1169 = vmatprep.subr.mxu0 0.0
        %1170 = vmatpush1.msra.mxu0 0.0
        %1171 = vmatprep.subr.mxu0 0.0
        %1172 = vmatpush1.msra.mxu0 0.0
        %1173 = vmatprep.subr.mxu0 0.0
        %1174 = vmatpush1.msra.mxu0 0.0
        %1175 = vmatprep.mubr.f32.mxu0 0.0
        %v1176 = vand.u32 %v533, 4294901760
        %1177 = vmatmul.mubr.f32.gmra.mrb[0].mxu0 %v1176
        %v1178 = vpop.f32.mrb[0].mxu0
        %v1179 = vadd.f32 %v1060, %v1178
        %v1180 = vpop.f32.mrb[0].mxu0
        %1181 = vmatprep.mubr.f32.mxu0 0.0
        %v1182 = vand.u32 %v535, 4294901760
        %1183 = vmatmul.mubr.f32.gmra.mrb[0].mxu0 %v1182
        %v1184 = vpop.f32.mrb[0].mxu0
        %v1185 = vadd.f32 %v1068, %v1184
        %v1186 = vpop.f32.mrb[0].mxu0
        %1187 = vmatprep.mubr.f32.mxu0 0.0
        %v1188 = vand.u32 %v537, 4294901760
        %1189 = vmatmul.mubr.f32.gmra.mrb[0].mxu0 %v1188
        %v1190 = vpop.f32.mrb[0].mxu0
        %v1191 = vadd.f32 %v1076, %v1190
        %v1192 = vpop.f32.mrb[0].mxu0
        %1193 = vdwg.mxu0
        %1194 = vmatprep.subr.mxu0 0.0
        %1195 = vmatpush1.msra.mxu0 %v630
        %1196 = vmatprep.subr.mxu0 0.0
        %1197 = vmatpush1.msra.mxu0 %v631
        %1198 = vmatprep.subr.mxu0 0.0
        %1199 = vmatpush1.msra.mxu0 %v632
        %1200 = vmatprep.subr.mxu0 0.0
        %1201 = vmatpush1.msra.mxu0 %v633
        %1202 = vmatprep.subr.mxu0 0.0
        %1203 = vmatpush1.msra.mxu0 %v634
        %1204 = vmatprep.subr.mxu0 0.0
        %1205 = vmatpush1.msra.mxu0 %v635
        %1206 = vmatprep.subr.mxu0 0.0
        %1207 = vmatpush1.msra.mxu0 %v636
        %1208 = vmatprep.subr.mxu0 0.0
        %1209 = vmatpush1.msra.mxu0 %v637
        %1210 = vmatprep.subr.mxu0 0.0
        %1211 = vmatpush1.msra.mxu0 %v638
        %1212 = vmatprep.subr.mxu0 0.0
        %1213 = vmatpush1.msra.mxu0 %v639
        %1214 = vmatprep.subr.mxu0 0.0
        %1215 = vmatpush1.msra.mxu0 %v640
        %1216 = vmatprep.subr.mxu0 0.0
        %1217 = vmatpush1.msra.mxu0 %v641
        %1218 = vmatprep.subr.mxu0 0.0
        %1219 = vmatpush1.msra.mxu0 %v642
        %1220 = vmatprep.subr.mxu0 0.0
        %1221 = vmatpush1.msra.mxu0 %v643
        %1222 = vmatprep.subr.mxu0 0.0
        %1223 = vmatpush1.msra.mxu0 %v644
        %1224 = vmatprep.subr.mxu0 0.0
        %1225 = vmatpush1.msra.mxu0 %v645
        %1226 = vmatprep.subr.mxu0 0.0
        %1227 = vmatpush1.msra.mxu0 0.0
        %1228 = vmatprep.subr.mxu0 0.0
        %1229 = vmatpush1.msra.mxu0 0.0
        %1230 = vmatprep.subr.mxu0 0.0
        %1231 = vmatpush1.msra.mxu0 0.0
        %1232 = vmatprep.subr.mxu0 0.0
        %1233 = vmatpush1.msra.mxu0 0.0
        %1234 = vmatprep.subr.mxu0 0.0
        %1235 = vmatpush1.msra.mxu0 0.0
        %1236 = vmatprep.subr.mxu0 0.0
        %1237 = vmatpush1.msra.mxu0 0.0
        %1238 = vmatprep.subr.mxu0 0.0
        %1239 = vmatpush1.msra.mxu0 0.0
        %1240 = vmatprep.subr.mxu0 0.0
        %1241 = vmatpush1.msra.mxu0 0.0
        %1242 = vmatprep.subr.mxu0 0.0
        %1243 = vmatpush1.msra.mxu0 0.0
        %1244 = vmatprep.subr.mxu0 0.0
        %1245 = vmatpush1.msra.mxu0 0.0
        %1246 = vmatprep.subr.mxu0 0.0
        %1247 = vmatpush1.msra.mxu0 0.0
        %1248 = vmatprep.subr.mxu0 0.0
        %1249 = vmatpush1.msra.mxu0 0.0
        %1250 = vmatprep.subr.mxu0 0.0
        %1251 = vmatpush1.msra.mxu0 0.0
        %1252 = vmatprep.subr.mxu0 0.0
        %1253 = vmatpush1.msra.mxu0 0.0
        %1254 = vmatprep.subr.mxu0 0.0
        %1255 = vmatpush1.msra.mxu0 0.0
        %1256 = vmatprep.subr.mxu0 0.0
        %1257 = vmatpush1.msra.mxu0 0.0
        %1258 = vmatprep.mubr.f32.mxu0 0.0
        %v1259 = vand.u32 %v533, 4294901760
        %1260 = vmatmul.mubr.f32.gmra.mrb[0].mxu0 %v1259
        %v1261 = vpop.f32.mrb[0].mxu0
        %v1262 = vadd.f32 %v1179, %v1261
        %v1263 = vpop.f32.mrb[0].mxu0
        %1264 = vmatprep.mubr.f32.mxu0 0.0
        %v1265 = vand.u32 %v535, 4294901760
        %1266 = vmatmul.mubr.f32.gmra.mrb[0].mxu0 %v1265
        %v1267 = vpop.f32.mrb[0].mxu0
        %v1268 = vadd.f32 %v1185, %v1267
        %v1269 = vpop.f32.mrb[0].mxu0
        %1270 = vmatprep.mubr.f32.mxu0 0.0
        %v1271 = vand.u32 %v537, 4294901760
        %1272 = vmatmul.mubr.f32.gmra.mrb[0].mxu0 %v1271
        %v1273 = vpop.f32.mrb[0].mxu0
        %v1274 = vadd.f32 %v1191, %v1273
        %v1275 = vpop.f32.mrb[0].mxu0
        %1276 = vdwg.mxu0
        %vm1277 = vcmask 15360
        %1278 = vst.msk [vmem:[%s226] sm:$0xff] %vm1277, %v1262
        %1279 = vst.msk [vmem:[%s226 + $0x8] sm:$0xff] %vm1277, %v1268
        %1280 = vst.msk [vmem:[%s226 + $0x10] sm:$0xff] %vm1277, %v1274
        %p1281 = scmp.lt.s32.totalorder %s19, 1
        %s1282 = scalar_select %p1281, %s19, 1
        %s1283 = smul.addr %s1282, 3
        %s1284 = smul.addr %s1283, 8
        %s1285 = scalar_lea.vmem %s3, %s1284
        %p1286 = scmp.lt.s32.totalorder %s19, 1
        %s1287 = scalar_select %p1286, %s19, 1
        %s1288 = smul.addr %s1287, 6
        %s1289 = smul.addr %s1288, 8
        %s1290 = scalar_lea.vmem %s4, %s1289
        // Predicated region
        $region37: #{tpu_custom_call.1} parent=31 // pred_check
          %p1291 = pneg %p105
        $region38: #{tpu_custom_call.1} parent=31 // pred_check_branch
          %1293 = sbr.rel (%p1291) target = $region40
        $region39: #{tpu_custom_call.1} parent=31 // pred_region
          _
        $region40: #{tpu_custom_call.1} parent=31 // pred_fallthru
          _
        // Predicated region
        $region41: #{tpu_custom_call.1} parent=31 // pred_check
          %p1294 = pneg %p131
        $region42: #{tpu_custom_call.1} parent=31 // pred_check_branch
          %1296 = sbr.rel (%p1294) target = $region44
        $region43: #{tpu_custom_call.1} parent=31 // pred_region
          _
        $region44: #{tpu_custom_call.1} parent=31 // pred_fallthru
          _
      $region32: #{tpu_custom_call.1} parent=5 // pred_fallthru
        _
      %p1297 = scmp.le.s32.totalorder 2, %s14
      // Predicated region
      $region45: #{tpu_custom_call.1} parent=5 // pred_check
        %p1298 = pneg %p1297
      $region46: #{tpu_custom_call.1} parent=5 // pred_check_branch
        %1300 = sbr.rel (%p1298) target = $region48
      $region47: #{tpu_custom_call.1} parent=5 // pred_region
        %s1301 = ssub.s32 %s14, 2
        // Predicated region
        $region49: #{tpu_custom_call.1} parent=47 // pred_check
          %p1302 = pneg %p111
        $region50: #{tpu_custom_call.1} parent=47 // pred_check_branch
          %1304 = sbr.rel (%p1302) target = $region52
        $region51: #{tpu_custom_call.1} parent=47 // pred_region
          %p1305 = scmp.lt.s32.totalorder %s20, 1
          %s1306 = scalar_select %p1305, %s20, 1
          %s1307 = smul.addr %s1306, 3
          %s1308 = smul.addr %s1307, 8
          %s1309 = scalar_lea.vmem %s3, %s1308
        $region52: #{tpu_custom_call.1} parent=47 // pred_fallthru
          _
        // Predicated region
        $region53: #{tpu_custom_call.1} parent=47 // pred_check
          %p1310 = pneg %p137
        $region54: #{tpu_custom_call.1} parent=47 // pred_check_branch
          %1312 = sbr.rel (%p1310) target = $region56
        $region55: #{tpu_custom_call.1} parent=47 // pred_region
          %p1313 = scmp.lt.s32.totalorder %s20, 1
          %s1314 = scalar_select %p1313, %s20, 1
          %s1315 = smul.addr %s1314, 6
          %s1316 = smul.addr %s1315, 8
          %s1317 = scalar_lea.vmem %s4, %s1316
        $region56: #{tpu_custom_call.1} parent=47 // pred_fallthru
          _
      $region48: #{tpu_custom_call.1} parent=5 // pred_fallthru
        _
    $region6: #{tpu_custom_call.1} parent=1 // loop_footer
      %s18 = sadd.s32 1, %s14
    $region7: #{tpu_custom_call.1} parent=1 // loop_footer_branch
      %13 = sbr.rel target = $region3
    $region8: #{tpu_custom_call.1} parent=1 // loop_exit
      _
    %1318 = vsyncpa [#allocation3], 1
    %s1319 = scalar_lea.sflag [#allocation3], 1
    %1320 = vsyncpa %s1319, 1

</llo_original>
